<compile_context>
chip_gen: v5e
topology: v5e:2x2
jax: 0.10.0
libtpu: 0.0.40
codegen_flags: <defaults>
</compile_context>

<pallas_src>
import functools
import math

import numpy as np
import jax
import jax.numpy as jnp
from jax.experimental import pallas as pl
from jax.experimental.pallas import tpu as pltpu

LN_EPS = 1e-5
HEAD_DIM = 32  # Mutihead_Attention: n_heads = input_dim // 32  =>  head dim 32


# ----------------------------------------------------------------------------
# fused per-batch kernel (grid = (B,))
# ----------------------------------------------------------------------------
def _transformer_kernel(x_ref, pe_ref, wqkv_ref, bqkv_ref, wo_ref, bo_ref,
                        w1_ref, b1_ref, w2_ref, b2_ref, o_ref, *, S, D):
    f32, bf16 = jnp.float32, jnp.bfloat16
    K = D // HEAD_DIM            # number of heads == number of 32-wide strips
    R = S // K                   # flat rows owned by each attention group
    scale = 1.0 / math.sqrt(D)   # norm_fact = 1 / sqrt(d_model)

    # x + positional encoding (same [S, D] PE block every grid step -> resident)
    xp = x_ref[...] + pe_ref[...]                                    # [S, D] f32

    # fused Q/K/V projection: one [S, D] x [D, 3D] MXU matmul, bf16 in / f32 acc
    qkv = jnp.dot(xp.astype(bf16), wqkv_ref[...],
                  preferred_element_type=f32) + bqkv_ref[...]        # [S, 3D]

    # ---- grouped "multi-head" attention (NO softmax), one group at a time ----
    # torch raw-reshapes [B,S,D] -> [H,B,S,32]; with S % K == 0 each attention
    # group (h, b') maps to R consecutive flat rows x all K column strips of
    # this batch tile.  Rows within a group may be processed in any fixed
    # permutation (scores and output permute consistently and there is no
    # softmax), so we stack the K 32-wide strips of the [R, D] block into one
    # [S, 32] operand, attend, and un-permute back into a lane-dense [R, D]
    # slab.  No mask, no cross-group score FLOPs.
    attn_rows = []
    for j in range(K):
        r0 = j * R

        def strips(col0, r0=r0):                        # [R, D] -> [S, 32]
            blk = qkv[r0:r0 + R, col0:col0 + D]
            return jnp.concatenate(
                [blk[:, p * HEAD_DIM:(p + 1) * HEAD_DIM] for p in range(K)],
                axis=0)

        qj = (strips(0) * scale).astype(bf16)           # fold 1/sqrt(D) into Q
        kj = strips(D).astype(bf16)
        vj = strips(2 * D).astype(bf16)

        sc = jax.lax.dot_general(qj, kj, (((1,), (1,)), ((), ())),
                                 preferred_element_type=f32)         # [S, S]
        oj = jnp.dot(sc.astype(bf16), vj,
                     preferred_element_type=f32)                     # [S, 32]
        # un-permute rows -> column strips: lane-dense [R, D] slab
        attn_rows.append(jnp.concatenate(
            [oj[p * R:(p + 1) * R, :] for p in range(K)], axis=1))
    attn = jnp.concatenate(attn_rows, axis=0)                        # [S, D]

    # single full-contraction output projection
    proj = jnp.dot(attn.astype(bf16), wo_ref[...],
                   preferred_element_type=f32) + bo_ref[...]         # [S, D]
    y1 = xp + proj
    # TODO(synk): nn.Dropout(0.1) would randomize here at train time; identity.

    # LayerNorm over the whole (S, D) tile (exactly one batch element):
    # gamma=1, beta=0, biased variance, eps=1e-5; two-pass stats.
    inv_n = 1.0 / float(S * D)

    def layer_norm(y):
        mu = jnp.sum(y, keepdims=True) * inv_n
        c = y - mu
        var = jnp.sum(c * c, keepdims=True) * inv_n
        return c * jax.lax.rsqrt(var + LN_EPS)

    ln1 = layer_norm(y1)

    # feed-forward D -> 2D -> D, residual, second Add & Norm
    hid = jnp.dot(ln1.astype(bf16), w1_ref[...],
                  preferred_element_type=f32) + b1_ref[...]          # [S, 2D]
    hid = jnp.maximum(hid, 0.0)
    y2 = ln1 + jnp.dot(hid.astype(bf16), w2_ref[...],
                       preferred_element_type=f32) + b2_ref[...]     # [S, D]

    o_ref[...] = layer_norm(y2)


# ----------------------------------------------------------------------------
# host-side constants / parameters / wrapper
# ----------------------------------------------------------------------------
def positional_encoding(seq_len, dim):
    # vectorized; quirk preserved: exponent uses the raw index i (not i // 2)
    pos = np.arange(seq_len, dtype=np.float64)[:, None]
    idx = np.arange(dim, dtype=np.float64)[None, :]
    angle = pos / np.power(10000.0, 2.0 * idx / dim)
    return np.where(np.arange(dim)[None, :] % 2 == 0,
                    np.sin(angle), np.cos(angle))          # float64 [S, D]


def init_params(key, D):
    ks = jax.random.split(key, 12)

    def lin(kw, kb, din, dout):
        # stored as [in, out] (already transposed vs torch's [out, in])
        w = jax.random.normal(kw, (din, dout), jnp.float32) * 0.05
        b = jax.random.normal(kb, (1, dout), jnp.float32) * 0.05
        return w, b

    wq, bq = lin(ks[0], ks[1], D, D)
    wk, bk = lin(ks[2], ks[3], D, D)
    wv, bv = lin(ks[4], ks[5], D, D)
    wo, bo = lin(ks[6], ks[7], D, D)
    w1, b1 = lin(ks[8], ks[9], D, 2 * D)
    w2, b2 = lin(ks[10], ks[11], 2 * D, D)
    bf = lambda w: w.astype(jnp.bfloat16)   # bf16 MXU operands, f32 accumulate
    return dict(wqkv=bf(jnp.concatenate([wq, wk, wv], axis=1)),   # [D, 3D] bf16
                bqkv=jnp.concatenate([bq, bk, bv], axis=1),       # [1, 3D] f32
                wo=bf(wo), bo=bo, w1=bf(w1), b1=b1, w2=bf(w2), b2=b2)


@jax.jit
def transformer_forward(x, params, pe):
    B, S, D = x.shape
    assert D % HEAD_DIM == 0, "input_dim must be a multiple of 32"
    K = D // HEAD_DIM
    assert S % K == 0, "this kernel requires seq_len % (input_dim // 32) == 0"
    M = B * S

    x2d = x.reshape(M, D).astype(jnp.float32)   # row-major == torch contiguous
    kernel = functools.partial(_transformer_kernel, S=S, D=D)

    res = lambda *_: (0, 0)                     # resident blocks (weights, PE)
    grid_spec = pltpu.PrefetchScalarGridSpec(
        num_scalar_prefetch=0,
        grid=(B,),                              # one batch element per step
        in_specs=[
            pl.BlockSpec((S, D), lambda b: (b, 0)),        # activation tile
            pl.BlockSpec((S, D), res),                     # positional encoding
            pl.BlockSpec((D, 3 * D), res),                 # wqkv (bf16)
            pl.BlockSpec((1, 3 * D), res),                 # bqkv (f32)
            pl.BlockSpec((D, D), res),                     # wo
            pl.BlockSpec((1, D), res),                     # bo
            pl.BlockSpec((D, 2 * D), res),                 # w1
            pl.BlockSpec((1, 2 * D), res),                 # b1
            pl.BlockSpec((2 * D, D), res),                 # w2
            pl.BlockSpec((1, D), res),                     # b2
        ],
        out_specs=pl.BlockSpec((S, D), lambda b: (b, 0)),
    )

    flops = (2 * M * D * 3 * D                    # QKV projection
             + 4 * B * K * S * S * HEAD_DIM       # attention (2 matmuls/group)
             + 2 * M * D * D                      # output projection
             + 8 * M * D * D)                     # FFN (D->2D->D)
    bytes_accessed = (4 * 2 * M * D + 4 * S * D
                      + 2 * 8 * D * D + 4 * 7 * D)

    out2d = pl.pallas_call(
        kernel,
        out_shape=jax.ShapeDtypeStruct((M, D), jnp.float32),
        grid_spec=grid_spec,
        compiler_params=pltpu.CompilerParams(
            dimension_semantics=("parallel",),    # megacore-shard batch on v7x
            vmem_limit_bytes=48 * 1024 * 1024),
        cost_estimate=pl.CostEstimate(flops=flops, transcendentals=2 * B,
                                      bytes_accessed=bytes_accessed),
    )(x2d, pe, params["wqkv"], params["bqkv"], params["wo"], params["bo"],
      params["w1"], params["b1"], params["w2"], params["b2"])
    return out2d.reshape(B, S, D)


# ----------------------------------------------------------------------------
# pure numpy (float64) reference mirroring the PyTorch module, for self-check
# ----------------------------------------------------------------------------
def reference_forward(x, params, pe_sd):
    to64 = lambda a: np.asarray(jax.device_get(a)).astype(np.float64)
    x = np.asarray(x, np.float64)
    p = {k: to64(v) for k, v in params.items()}
    B, S, D = x.shape
    H = D // HEAD_DIM
    scale = 1.0 / math.sqrt(D)

    x2 = (x + np.asarray(pe_sd, np.float64)[None]).reshape(B * S, D)
    qkv = x2 @ p["wqkv"] + p["bqkv"]
    q, k, v = qkv[:, :D], qkv[:, D:2 * D], qkv[:, 2 * D:]
    Q = q.reshape(H, B, S, HEAD_DIM)
    K_ = k.reshape(H, B, S, HEAD_DIM)
    V = v.reshape(H, B, S, HEAD_DIM)
    scores = np.einsum("hbsc,hbtc->hbst", Q, K_) * scale       # no softmax
    attn = np.einsum("hbst,hbtc->hbsc", scores, V).reshape(B * S, D)
    y1 = x2 + attn @ p["wo"] + p["bo"]

    def ln(y):
        yb = y.reshape(B, S * D)
        m = yb.mean(axis=1, keepdims=True)
        var = ((yb - m) ** 2).mean(axis=1, keepdims=True)
        return ((yb - m) / np.sqrt(var + LN_EPS)).reshape(B * S, D)

    l1 = ln(y1)
    h = np.maximum(l1 @ p["w1"] + p["b1"], 0.0)
    y2 = l1 + h @ p["w2"] + p["b2"]
    return ln(y2).reshape(B, S, D)


if __name__ == "__main__":
    B, S, D = 2, 8, 64       # D multiple of 32 (n_heads = D // 32); S % (D//32) == 0
    key = jax.random.PRNGKey(0)
    kx, kp = jax.random.split(key)
    x = jax.random.normal(kx, (B, S, D), dtype=jnp.float32)
    params = init_params(kp, D)
    pe = jnp.asarray(positional_encoding(S, D).astype(np.float32))   # [S, D]

    out = jax.block_until_ready(transformer_forward(x, params, pe))

    assert out.shape == (B, S, D) and out.dtype == jnp.float32
    assert bool(jnp.all(jnp.isfinite(out)))

    ref = reference_forward(np.asarray(x), params, positional_encoding(S, D))
    err = float(np.max(np.abs(np.asarray(out, dtype=np.float64) - ref)))
    # tolerance accounts for bf16 MXU operands (f32 accumulation)
    assert err < 5e-2, f"kernel deviates from reference: max abs err = {err}"

    print("KERNEL_OK")
</pallas_src>

<mosaic_0001>
module attributes {stable_mosaic.version = 11 : i64} {
  func.func @_transformer_kernel(%arg0: i32, %arg1: memref<8x64xf32, #tpu.memory_space<vmem>>, %arg2: memref<8x64xf32, #tpu.memory_space<vmem>>, %arg3: memref<64x192xbf16, #tpu.memory_space<vmem>>, %arg4: memref<1x192xf32, #tpu.memory_space<vmem>>, %arg5: memref<64x64xbf16, #tpu.memory_space<vmem>>, %arg6: memref<1x64xf32, #tpu.memory_space<vmem>>, %arg7: memref<64x128xbf16, #tpu.memory_space<vmem>>, %arg8: memref<1x128xf32, #tpu.memory_space<vmem>>, %arg9: memref<128x64xbf16, #tpu.memory_space<vmem>>, %arg10: memref<1x64xf32, #tpu.memory_space<vmem>>, %arg11: memref<8x64xf32, #tpu.memory_space<vmem>>) attributes {dimension_semantics = [#tpu.dimension_semantics<parallel>], iteration_bounds = array<i64: 2>, scalar_prefetch = 0 : i64, scratch_operands = 0 : i64, tpu.core_type = #tpu.core_type<tc>, window_params = [{transform_indices = @transform_0, window_bounds = array<i64: 8, 64>}, {pipeline_mode = #tpu.pipeline_mode<synchronous>, transform_indices = @transform_1, window_bounds = array<i64: 8, 64>}, {pipeline_mode = #tpu.pipeline_mode<synchronous>, transform_indices = @transform_2, window_bounds = array<i64: 64, 192>}, {pipeline_mode = #tpu.pipeline_mode<synchronous>, transform_indices = @transform_3, window_bounds = array<i64: 1, 192>}, {pipeline_mode = #tpu.pipeline_mode<synchronous>, transform_indices = @transform_4, window_bounds = array<i64: 64, 64>}, {pipeline_mode = #tpu.pipeline_mode<synchronous>, transform_indices = @transform_5, window_bounds = array<i64: 1, 64>}, {pipeline_mode = #tpu.pipeline_mode<synchronous>, transform_indices = @transform_6, window_bounds = array<i64: 64, 128>}, {pipeline_mode = #tpu.pipeline_mode<synchronous>, transform_indices = @transform_7, window_bounds = array<i64: 1, 128>}, {pipeline_mode = #tpu.pipeline_mode<synchronous>, transform_indices = @transform_8, window_bounds = array<i64: 128, 64>}, {pipeline_mode = #tpu.pipeline_mode<synchronous>, transform_indices = @transform_9, window_bounds = array<i64: 1, 64>}, {transform_indices = @transform_10, window_bounds = array<i64: 8, 64>}]} {
    %c0 = arith.constant 0 : index
    %c0_0 = arith.constant 0 : index
    %0 = vector.load %arg1[%c0, %c0_0] : memref<8x64xf32, #tpu.memory_space<vmem>>, vector<8x64xf32>
    %c0_1 = arith.constant 0 : index
    %c0_2 = arith.constant 0 : index
    %1 = vector.load %arg2[%c0_1, %c0_2] : memref<8x64xf32, #tpu.memory_space<vmem>>, vector<8x64xf32>
    %2 = arith.addf %0, %1 : vector<8x64xf32>
    %3 = arith.truncf %2 : vector<8x64xf32> to vector<8x64xbf16>
    %c0_3 = arith.constant 0 : index
    %c0_4 = arith.constant 0 : index
    %4 = vector.load %arg3[%c0_3, %c0_4] : memref<64x192xbf16, #tpu.memory_space<vmem>>, vector<64x192xbf16>
    %cst = arith.constant dense<0.000000e+00> : vector<8x192xf32>
    %5 = tpu.matmul %3, %4, %cst {dimension_numbers = #tpu.dot_dimension_numbers<[1], [0], [0], [1], [0, 0, 1, 1], [], []>} : vector<8x64xbf16>, vector<64x192xbf16>, vector<8x192xf32> -> vector<8x192xf32>
    %c0_5 = arith.constant 0 : index
    %c0_6 = arith.constant 0 : index
    %6 = vector.load %arg4[%c0_5, %c0_6] : memref<1x192xf32, #tpu.memory_space<vmem>>, vector<1x192xf32>
    %7 = vector.broadcast %6 : vector<1x192xf32> to vector<8x192xf32>
    %8 = arith.addf %5, %7 : vector<8x192xf32>
    %9 = vector.extract_strided_slice %8 {offsets = [0, 0], sizes = [4, 64], strides = [1, 1]} : vector<8x192xf32> to vector<4x64xf32>
    %10 = vector.extract_strided_slice %9 {offsets = [0, 0], sizes = [4, 32], strides = [1, 1]} : vector<4x64xf32> to vector<4x32xf32>
    %11 = vector.extract_strided_slice %9 {offsets = [0, 32], sizes = [4, 32], strides = [1, 1]} : vector<4x64xf32> to vector<4x32xf32>
    %12 = tpu.concatenate %10, %11 in 0 : vector<4x32xf32>, vector<4x32xf32> -> vector<8x32xf32>
    %cst_7 = arith.constant 1.250000e-01 : f32
    %13 = vector.broadcast %cst_7 : f32 to vector<8x32xf32>
    %14 = arith.mulf %12, %13 : vector<8x32xf32>
    %15 = arith.truncf %14 : vector<8x32xf32> to vector<8x32xbf16>
    %16 = vector.extract_strided_slice %8 {offsets = [0, 64], sizes = [4, 64], strides = [1, 1]} : vector<8x192xf32> to vector<4x64xf32>
    %17 = vector.extract_strided_slice %16 {offsets = [0, 0], sizes = [4, 32], strides = [1, 1]} : vector<4x64xf32> to vector<4x32xf32>
    %18 = vector.extract_strided_slice %16 {offsets = [0, 32], sizes = [4, 32], strides = [1, 1]} : vector<4x64xf32> to vector<4x32xf32>
    %19 = tpu.concatenate %17, %18 in 0 : vector<4x32xf32>, vector<4x32xf32> -> vector<8x32xf32>
    %20 = arith.truncf %19 : vector<8x32xf32> to vector<8x32xbf16>
    %21 = vector.extract_strided_slice %8 {offsets = [0, 128], sizes = [4, 64], strides = [1, 1]} : vector<8x192xf32> to vector<4x64xf32>
    %22 = vector.extract_strided_slice %21 {offsets = [0, 0], sizes = [4, 32], strides = [1, 1]} : vector<4x64xf32> to vector<4x32xf32>
    %23 = vector.extract_strided_slice %21 {offsets = [0, 32], sizes = [4, 32], strides = [1, 1]} : vector<4x64xf32> to vector<4x32xf32>
    %24 = tpu.concatenate %22, %23 in 0 : vector<4x32xf32>, vector<4x32xf32> -> vector<8x32xf32>
    %25 = arith.truncf %24 : vector<8x32xf32> to vector<8x32xbf16>
    %cst_8 = arith.constant dense<0.000000e+00> : vector<8x8xf32>
    %26 = tpu.matmul %15, %20, %cst_8 {dimension_numbers = #tpu.dot_dimension_numbers<[1], [1], [0], [0], [0, 0, 1, 0], [], []>} : vector<8x32xbf16>, vector<8x32xbf16>, vector<8x8xf32> -> vector<8x8xf32>
    %27 = arith.truncf %26 : vector<8x8xf32> to vector<8x8xbf16>
    %cst_9 = arith.constant dense<0.000000e+00> : vector<8x32xf32>
    %28 = tpu.matmul %27, %25, %cst_9 {dimension_numbers = #tpu.dot_dimension_numbers<[1], [0], [0], [1], [0, 0, 1, 1], [], []>} : vector<8x8xbf16>, vector<8x32xbf16>, vector<8x32xf32> -> vector<8x32xf32>
    %29 = vector.extract_strided_slice %28 {offsets = [0, 0], sizes = [4, 32], strides = [1, 1]} : vector<8x32xf32> to vector<4x32xf32>
    %30 = vector.extract_strided_slice %28 {offsets = [4, 0], sizes = [4, 32], strides = [1, 1]} : vector<8x32xf32> to vector<4x32xf32>
    %31 = tpu.concatenate %29, %30 in 1 : vector<4x32xf32>, vector<4x32xf32> -> vector<4x64xf32>
    %32 = vector.extract_strided_slice %8 {offsets = [4, 0], sizes = [4, 64], strides = [1, 1]} : vector<8x192xf32> to vector<4x64xf32>
    %33 = vector.extract_strided_slice %32 {offsets = [0, 0], sizes = [4, 32], strides = [1, 1]} : vector<4x64xf32> to vector<4x32xf32>
    %34 = vector.extract_strided_slice %32 {offsets = [0, 32], sizes = [4, 32], strides = [1, 1]} : vector<4x64xf32> to vector<4x32xf32>
    %35 = tpu.concatenate %33, %34 in 0 : vector<4x32xf32>, vector<4x32xf32> -> vector<8x32xf32>
    %cst_10 = arith.constant 1.250000e-01 : f32
    %36 = vector.broadcast %cst_10 : f32 to vector<8x32xf32>
    %37 = arith.mulf %35, %36 : vector<8x32xf32>
    %38 = arith.truncf %37 : vector<8x32xf32> to vector<8x32xbf16>
    %39 = vector.extract_strided_slice %8 {offsets = [4, 64], sizes = [4, 64], strides = [1, 1]} : vector<8x192xf32> to vector<4x64xf32>
    %40 = vector.extract_strided_slice %39 {offsets = [0, 0], sizes = [4, 32], strides = [1, 1]} : vector<4x64xf32> to vector<4x32xf32>
    %41 = vector.extract_strided_slice %39 {offsets = [0, 32], sizes = [4, 32], strides = [1, 1]} : vector<4x64xf32> to vector<4x32xf32>
    %42 = tpu.concatenate %40, %41 in 0 : vector<4x32xf32>, vector<4x32xf32> -> vector<8x32xf32>
    %43 = arith.truncf %42 : vector<8x32xf32> to vector<8x32xbf16>
    %44 = vector.extract_strided_slice %8 {offsets = [4, 128], sizes = [4, 64], strides = [1, 1]} : vector<8x192xf32> to vector<4x64xf32>
    %45 = vector.extract_strided_slice %44 {offsets = [0, 0], sizes = [4, 32], strides = [1, 1]} : vector<4x64xf32> to vector<4x32xf32>
    %46 = vector.extract_strided_slice %44 {offsets = [0, 32], sizes = [4, 32], strides = [1, 1]} : vector<4x64xf32> to vector<4x32xf32>
    %47 = tpu.concatenate %45, %46 in 0 : vector<4x32xf32>, vector<4x32xf32> -> vector<8x32xf32>
    %48 = arith.truncf %47 : vector<8x32xf32> to vector<8x32xbf16>
    %cst_11 = arith.constant dense<0.000000e+00> : vector<8x8xf32>
    %49 = tpu.matmul %38, %43, %cst_11 {dimension_numbers = #tpu.dot_dimension_numbers<[1], [1], [0], [0], [0, 0, 1, 0], [], []>} : vector<8x32xbf16>, vector<8x32xbf16>, vector<8x8xf32> -> vector<8x8xf32>
    %50 = arith.truncf %49 : vector<8x8xf32> to vector<8x8xbf16>
    %cst_12 = arith.constant dense<0.000000e+00> : vector<8x32xf32>
    %51 = tpu.matmul %50, %48, %cst_12 {dimension_numbers = #tpu.dot_dimension_numbers<[1], [0], [0], [1], [0, 0, 1, 1], [], []>} : vector<8x8xbf16>, vector<8x32xbf16>, vector<8x32xf32> -> vector<8x32xf32>
    %52 = vector.extract_strided_slice %51 {offsets = [0, 0], sizes = [4, 32], strides = [1, 1]} : vector<8x32xf32> to vector<4x32xf32>
    %53 = vector.extract_strided_slice %51 {offsets = [4, 0], sizes = [4, 32], strides = [1, 1]} : vector<8x32xf32> to vector<4x32xf32>
    %54 = tpu.concatenate %52, %53 in 1 : vector<4x32xf32>, vector<4x32xf32> -> vector<4x64xf32>
    %55 = tpu.concatenate %31, %54 in 0 : vector<4x64xf32>, vector<4x64xf32> -> vector<8x64xf32>
    %56 = arith.truncf %55 : vector<8x64xf32> to vector<8x64xbf16>
    %c0_13 = arith.constant 0 : index
    %c0_14 = arith.constant 0 : index
    %57 = vector.load %arg5[%c0_13, %c0_14] : memref<64x64xbf16, #tpu.memory_space<vmem>>, vector<64x64xbf16>
    %cst_15 = arith.constant dense<0.000000e+00> : vector<8x64xf32>
    %58 = tpu.matmul %56, %57, %cst_15 {dimension_numbers = #tpu.dot_dimension_numbers<[1], [0], [0], [1], [0, 0, 1, 1], [], []>} : vector<8x64xbf16>, vector<64x64xbf16>, vector<8x64xf32> -> vector<8x64xf32>
    %c0_16 = arith.constant 0 : index
    %c0_17 = arith.constant 0 : index
    %59 = vector.load %arg6[%c0_16, %c0_17] : memref<1x64xf32, #tpu.memory_space<vmem>>, vector<1x64xf32>
    %60 = vector.broadcast %59 : vector<1x64xf32> to vector<8x64xf32>
    %61 = arith.addf %58, %60 : vector<8x64xf32>
    %62 = arith.addf %2, %61 : vector<8x64xf32>
    %63 = vector.shape_cast %62 : vector<8x64xf32> to vector<1x8x64xf32>
    %cst_18 = arith.constant dense<0.000000e+00> : vector<1xf32>
    %64 = vector.multi_reduction <add>, %63, %cst_18 [1, 2] : vector<1x8x64xf32> to vector<1xf32>
    %65 = vector.shape_cast %64 : vector<1xf32> to vector<1x1x1xf32>
    %66 = vector.extract %65[0, 0, 0] : f32 from vector<1x1x1xf32>
    %67 = vector.broadcast %66 : f32 to vector<1x1xf32>
    %cst_19 = arith.constant 0.001953125 : f32
    %68 = vector.broadcast %cst_19 : f32 to vector<1x1xf32>
    %69 = arith.mulf %67, %68 : vector<1x1xf32>
    %70 = vector.broadcast %69 : vector<1x1xf32> to vector<8x64xf32>
    %71 = arith.subf %62, %70 : vector<8x64xf32>
    %72 = arith.mulf %71, %71 : vector<8x64xf32>
    %73 = vector.shape_cast %72 : vector<8x64xf32> to vector<1x8x64xf32>
    %cst_20 = arith.constant dense<0.000000e+00> : vector<1xf32>
    %74 = vector.multi_reduction <add>, %73, %cst_20 [1, 2] : vector<1x8x64xf32> to vector<1xf32>
    %75 = vector.shape_cast %74 : vector<1xf32> to vector<1x1x1xf32>
    %76 = vector.extract %75[0, 0, 0] : f32 from vector<1x1x1xf32>
    %77 = vector.broadcast %76 : f32 to vector<1x1xf32>
    %cst_21 = arith.constant 0.001953125 : f32
    %78 = vector.broadcast %cst_21 : f32 to vector<1x1xf32>
    %79 = arith.mulf %77, %78 : vector<1x1xf32>
    %cst_22 = arith.constant 9.99999974E-6 : f32
    %80 = vector.broadcast %cst_22 : f32 to vector<1x1xf32>
    %81 = arith.addf %79, %80 : vector<1x1xf32>
    %82 = math.rsqrt %81 : vector<1x1xf32>
    %83 = vector.broadcast %82 : vector<1x1xf32> to vector<8x64xf32>
    %84 = arith.mulf %71, %83 : vector<8x64xf32>
    %85 = arith.truncf %84 : vector<8x64xf32> to vector<8x64xbf16>
    %c0_23 = arith.constant 0 : index
    %c0_24 = arith.constant 0 : index
    %86 = vector.load %arg7[%c0_23, %c0_24] : memref<64x128xbf16, #tpu.memory_space<vmem>>, vector<64x128xbf16>
    %cst_25 = arith.constant dense<0.000000e+00> : vector<8x128xf32>
    %87 = tpu.matmul %85, %86, %cst_25 {dimension_numbers = #tpu.dot_dimension_numbers<[1], [0], [0], [1], [0, 0, 1, 1], [], []>} : vector<8x64xbf16>, vector<64x128xbf16>, vector<8x128xf32> -> vector<8x128xf32>
    %c0_26 = arith.constant 0 : index
    %c0_27 = arith.constant 0 : index
    %88 = vector.load %arg8[%c0_26, %c0_27] : memref<1x128xf32, #tpu.memory_space<vmem>>, vector<1x128xf32>
    %89 = vector.broadcast %88 : vector<1x128xf32> to vector<8x128xf32>
    %90 = arith.addf %87, %89 : vector<8x128xf32>
    %cst_28 = arith.constant 0.000000e+00 : f32
    %91 = vector.broadcast %cst_28 : f32 to vector<8x128xf32>
    %92 = arith.maximumf %90, %91 : vector<8x128xf32>
    %93 = arith.truncf %92 : vector<8x128xf32> to vector<8x128xbf16>
    %c0_29 = arith.constant 0 : index
    %c0_30 = arith.constant 0 : index
    %94 = vector.load %arg9[%c0_29, %c0_30] : memref<128x64xbf16, #tpu.memory_space<vmem>>, vector<128x64xbf16>
    %cst_31 = arith.constant dense<0.000000e+00> : vector<8x64xf32>
    %95 = tpu.matmul %93, %94, %cst_31 {dimension_numbers = #tpu.dot_dimension_numbers<[1], [0], [0], [1], [0, 0, 1, 1], [], []>} : vector<8x128xbf16>, vector<128x64xbf16>, vector<8x64xf32> -> vector<8x64xf32>
    %96 = arith.addf %84, %95 : vector<8x64xf32>
    %c0_32 = arith.constant 0 : index
    %c0_33 = arith.constant 0 : index
    %97 = vector.load %arg10[%c0_32, %c0_33] : memref<1x64xf32, #tpu.memory_space<vmem>>, vector<1x64xf32>
    %98 = vector.broadcast %97 : vector<1x64xf32> to vector<8x64xf32>
    %99 = arith.addf %96, %98 : vector<8x64xf32>
    %100 = vector.shape_cast %99 : vector<8x64xf32> to vector<1x8x64xf32>
    %cst_34 = arith.constant dense<0.000000e+00> : vector<1xf32>
    %101 = vector.multi_reduction <add>, %100, %cst_34 [1, 2] : vector<1x8x64xf32> to vector<1xf32>
    %102 = vector.shape_cast %101 : vector<1xf32> to vector<1x1x1xf32>
    %103 = vector.extract %102[0, 0, 0] : f32 from vector<1x1x1xf32>
    %104 = vector.broadcast %103 : f32 to vector<1x1xf32>
    %cst_35 = arith.constant 0.001953125 : f32
    %105 = vector.broadcast %cst_35 : f32 to vector<1x1xf32>
    %106 = arith.mulf %104, %105 : vector<1x1xf32>
    %107 = vector.broadcast %106 : vector<1x1xf32> to vector<8x64xf32>
    %108 = arith.subf %99, %107 : vector<8x64xf32>
    %109 = arith.mulf %108, %108 : vector<8x64xf32>
    %110 = vector.shape_cast %109 : vector<8x64xf32> to vector<1x8x64xf32>
    %cst_36 = arith.constant dense<0.000000e+00> : vector<1xf32>
    %111 = vector.multi_reduction <add>, %110, %cst_36 [1, 2] : vector<1x8x64xf32> to vector<1xf32>
    %112 = vector.shape_cast %111 : vector<1xf32> to vector<1x1x1xf32>
    %113 = vector.extract %112[0, 0, 0] : f32 from vector<1x1x1xf32>
    %114 = vector.broadcast %113 : f32 to vector<1x1xf32>
    %cst_37 = arith.constant 0.001953125 : f32
    %115 = vector.broadcast %cst_37 : f32 to vector<1x1xf32>
    %116 = arith.mulf %114, %115 : vector<1x1xf32>
    %cst_38 = arith.constant 9.99999974E-6 : f32
    %117 = vector.broadcast %cst_38 : f32 to vector<1x1xf32>
    %118 = arith.addf %116, %117 : vector<1x1xf32>
    %119 = math.rsqrt %118 : vector<1x1xf32>
    %120 = vector.broadcast %119 : vector<1x1xf32> to vector<8x64xf32>
    %121 = arith.mulf %108, %120 : vector<8x64xf32>
    %c0_39 = arith.constant 0 : index
    %c0_40 = arith.constant 0 : index
    %122 = vector.load %arg11[%c0_39, %c0_40] : memref<8x64xf32, #tpu.memory_space<vmem>>, vector<8x64xf32>
    tpu.vector_store %arg11[%c0_39, %c0_40], %121 {strides = array<i32>} : memref<8x64xf32, #tpu.memory_space<vmem>>, vector<8x64xf32>,
    return
  }
  func.func @transform_0(%arg0: i32) -> (i32, i32) {
    %c0_i32 = arith.constant 0 : i32
    %c0_i32_0 = arith.constant 0 : i32
    return %arg0, %c0_i32 : i32, i32
  }
  func.func @transform_1(%arg0: i32) -> (i32, i32) {
    %c0_i32 = arith.constant 0 : i32
    %c0_i32_0 = arith.constant 0 : i32
    %c0_i32_1 = arith.constant 0 : i32
    return %c0_i32, %c0_i32_0 : i32, i32
  }
  func.func @transform_2(%arg0: i32) -> (i32, i32) {
    %c0_i32 = arith.constant 0 : i32
    %c0_i32_0 = arith.constant 0 : i32
    %c0_i32_1 = arith.constant 0 : i32
    return %c0_i32, %c0_i32_0 : i32, i32
  }
  func.func @transform_3(%arg0: i32) -> (i32, i32) {
    %c0_i32 = arith.constant 0 : i32
    %c0_i32_0 = arith.constant 0 : i32
    %c0_i32_1 = arith.constant 0 : i32
    return %c0_i32, %c0_i32_0 : i32, i32
  }
  func.func @transform_4(%arg0: i32) -> (i32, i32) {
    %c0_i32 = arith.constant 0 : i32
    %c0_i32_0 = arith.constant 0 : i32
    %c0_i32_1 = arith.constant 0 : i32
    return %c0_i32, %c0_i32_0 : i32, i32
  }
  func.func @transform_5(%arg0: i32) -> (i32, i32) {
    %c0_i32 = arith.constant 0 : i32
    %c0_i32_0 = arith.constant 0 : i32
    %c0_i32_1 = arith.constant 0 : i32
    return %c0_i32, %c0_i32_0 : i32, i32
  }
  func.func @transform_6(%arg0: i32) -> (i32, i32) {
    %c0_i32 = arith.constant 0 : i32
    %c0_i32_0 = arith.constant 0 : i32
    %c0_i32_1 = arith.constant 0 : i32
    return %c0_i32, %c0_i32_0 : i32, i32
  }
  func.func @transform_7(%arg0: i32) -> (i32, i32) {
    %c0_i32 = arith.constant 0 : i32
    %c0_i32_0 = arith.constant 0 : i32
    %c0_i32_1 = arith.constant 0 : i32
    return %c0_i32, %c0_i32_0 : i32, i32
  }
  func.func @transform_8(%arg0: i32) -> (i32, i32) {
    %c0_i32 = arith.constant 0 : i32
    %c0_i32_0 = arith.constant 0 : i32
    %c0_i32_1 = arith.constant 0 : i32
    return %c0_i32, %c0_i32_0 : i32, i32
  }
  func.func @transform_9(%arg0: i32) -> (i32, i32) {
    %c0_i32 = arith.constant 0 : i32
    %c0_i32_0 = arith.constant 0 : i32
    %c0_i32_1 = arith.constant 0 : i32
    return %c0_i32, %c0_i32_0 : i32, i32
  }
  func.func @transform_10(%arg0: i32) -> (i32, i32) {
    %c0_i32 = arith.constant 0 : i32
    %c0_i32_0 = arith.constant 0 : i32
    return %arg0, %c0_i32 : i32, i32
  }
}

</mosaic_0001>

<llo_original>
// kernel: transformer_forward.1
$region0: #{transformer_forward.1}
  #allocation0 [shape = 'u32[]', space=smem, size = 0x4, offset = 0x4, fixed_abs, tag = 'smem constant byte address 0x4 - core index']
  #allocation1 [shape = 'u32[72,128]{1,0:T(1,128)}', space=vmem, size = 0x9000, scoped, tag = 'internal scratch']
  %s0 = inlined_call_operand.hbm [shape: f32[16,64], index: 0, kind: input, shape index: {}]
  %s1 = inlined_call_operand.vmem [shape: f32[8,64], index: 1, kind: input, shape index: {}]
  %s2 = inlined_call_operand.vmem [shape: bf16[64,192], index: 2, kind: input, shape index: {}]
  %s3 = inlined_call_operand.hbm [shape: f32[1,192], index: 3, kind: input, shape index: {}]
  %s4 = inlined_call_operand.vmem [shape: bf16[64,64], index: 4, kind: input, shape index: {}]
  %s5 = inlined_call_operand.hbm [shape: f32[1,64], index: 5, kind: input, shape index: {}]
  %s6 = inlined_call_operand.hbm [shape: bf16[64,128], index: 6, kind: input, shape index: {}]
  %s7 = inlined_call_operand.hbm [shape: f32[1,128], index: 7, kind: input, shape index: {}]
  %s8 = inlined_call_operand.vmem [shape: bf16[128,64], index: 8, kind: input, shape index: {}]
  %s9 = inlined_call_operand.hbm [shape: f32[1,64], index: 9, kind: input, shape index: {}]
  %s10 = inlined_call_operand.hbm [shape: f32[16,64], index: 10, kind: output, shape index: {}]
  %s11 = sld [smem:[#allocation0]]
  $region97: #{transformer_forward.1} parent=0
    _
  %s13 = ssub.s32 1, %s11
  %s14 = scalar_select 0, %s13, %s11
  $region1: #{transformer_forward.1} parent=0
    #allocation2 [shape = 'u8[8192]{0}', space=vmem, size = 0x2000, scoped, tag = 'input window, operand 0']
    #allocation3 [shape = 's32[2]{0}', space=sflag, size = 0x8, scoped, tag = 'scoped memory for transformer_forward.1']
    #allocation4 [shape = 's32[2]{0}', space=sflag, size = 0x8, scoped, tag = 'scoped memory for transformer_forward.1']
    #allocation5 [shape = 'u8[1024]{0}', space=vmem, size = 0x400, scoped, tag = 'input window, operand 3, single buffered']
    #allocation6 [shape = 's32[1]{0}', space=sflag, size = 0x4, scoped, tag = 'scoped memory for transformer_forward.1']
    #allocation7 [shape = 'u8[512]{0}', space=vmem, size = 0x400, scoped, tag = 'input window, operand 5, single buffered']
    #allocation8 [shape = 'u8[16384]{0}', space=vmem, size = 0x4000, scoped, tag = 'input window, operand 6, single buffered']
    #allocation9 [shape = 's32[1]{0}', space=sflag, size = 0x4, scoped, tag = 'scoped memory for transformer_forward.1']
    #allocation10 [shape = 'u8[512]{0}', space=vmem, size = 0x400, scoped, tag = 'input window, operand 7, single buffered']
    #allocation11 [shape = 'u8[512]{0}', space=vmem, size = 0x400, scoped, tag = 'input window, operand 9, single buffered']
    #allocation12 [shape = 's32[1]{0}', space=sflag, size = 0x4, scoped, tag = 'scoped memory for transformer_forward.1']
    #allocation13 [shape = 'u8[8192]{0}', space=vmem, size = 0x2000, scoped, tag = 'output window, operand 0']
    %15 = vsyncpa [#allocation3], 0
    %s16 = scalar_lea.sflag [#allocation3], 1
    %17 = vsyncpa %s16, 0
    %18 = vsyncpa [#allocation6], 0
    %19 = vsyncpa [#allocation9], 0
    %20 = vsyncpa [#allocation12], 0
    %21 = vsyncpa [#allocation4], 0
    %s22 = scalar_lea.sflag [#allocation4], 1
    %23 = vsyncpa %s22, 0
    loop: start=0, step=1, limit=4
    $region2: #{transformer_forward.1} parent=1 // loop_pre_header
      _
    $region3: #{transformer_forward.1} parent=1 // loop_header
      %s25 = sphi 0, %s29
      %p26 = scmp.ge.s32.totalorder %s25, 4
      %s35 = sphi 0, %s37
      %s38 = sphi 0, %s35
      %s39 = sphi 0, %s38
      %s55 = sphi 0, %s39
      %s59 = sphi 0, %s59
      %s61 = sphi 0, %s59
      %s62 = sphi 0, %s61
      %s76 = sphi 0, %s62
      %s80 = sphi 0, %s80
      %s82 = sphi 0, %s80
      %s83 = sphi 0, %s82
      %s97 = sphi 0, %s83
      %s101 = sphi 0, %s101
      %s103 = sphi 0, %s101
      %s104 = sphi 0, %s103
      %s118 = sphi 0, %s104
      %s122 = sphi 0, %s122
      %s124 = sphi 0, %s122
      %s125 = sphi 0, %s124
      %s139 = sphi 0, %s125
      %s143 = sphi 0, %s143
      %s145 = sphi 0, %s143
      %s146 = sphi 0, %s145
      %s160 = sphi 0, %s146
      %s164 = sphi 0, %s164
      %s166 = sphi 0, %s164
      %s167 = sphi 0, %s166
      %s181 = sphi 0, %s167
      %s185 = sphi 0, %s185
      %s187 = sphi 0, %s185
      %s188 = sphi 0, %s187
      %s202 = sphi 0, %s188
      %s206 = sphi 0, %s206
      %s208 = sphi 0, %s206
      %s209 = sphi 0, %s208
      %s223 = sphi 0, %s209
      %s227 = sphi 0, %s227
      %s229 = sphi 0, %s227
      %s230 = sphi 0, %s229
      %s244 = sphi 0, %s230
      %s250 = sphi 0, %s252
      %s253 = sphi 0, %s250
      %s254 = sphi 0, %s253
      %s270 = sphi 0, %s254
    $region4: #{transformer_forward.1} parent=1 // loop_header_branch
      %28 = sbr.rel (%p26) target = $region8
    $region5: #{transformer_forward.1} parent=1 // loop_body
      %s30 = ssub.s32 %s25, 1
      %s31 = ssub.s32 %s25, 2
      %s32 = sadd.s32 %s25, 1
      %s33 = ssub.s32 %s25, %s32
      %p34 = scmp.eq.s32.totalorder %s33, 0
      %s36 = sadd.s32 %s35, 1
      %s37 = scalar_select %p34, %s35, %s36
      %p40 = pneg %p34
      %p41 = scmp.eq.s32.totalorder %s25, 1
      %p42 = por %p40, %p41
      %p43 = scmp.ne.s32.totalorder %s35, %s38
      %p44 = scmp.eq.s32.totalorder %s25, 0
      %p45 = por %p43, %p44
      %p46 = scmp.ne.s32.totalorder %s35, %s38
      %p47 = scmp.eq.s32.totalorder %s30, 1
      %p48 = por %p46, %p47
      %p49 = scmp.ne.s32.totalorder %s38, %s39
      %p50 = scmp.eq.s32.totalorder %s30, 0
      %p51 = por %p49, %p50
      %p52 = scmp.ne.s32.totalorder %s38, %s39
      %p53 = scmp.eq.s32.totalorder %s31, 1
      %p54 = por %p52, %p53
      %p56 = scmp.ne.s32.totalorder %s39, %s55
      %p57 = scmp.eq.s32.totalorder %s31, 0
      %p58 = por %p56, %p57
      %s60 = sadd.s32 %s59, 1
      %p63 = scmp.eq.s32.totalorder %s25, 1
      %p64 = scmp.ne.s32.totalorder %s59, %s61
      %p65 = scmp.eq.s32.totalorder %s25, 0
      %p66 = por %p64, %p65
      %p67 = scmp.ne.s32.totalorder %s59, %s61
      %p68 = scmp.eq.s32.totalorder %s30, 1
      %p69 = por %p67, %p68
      %p70 = scmp.ne.s32.totalorder %s61, %s62
      %p71 = scmp.eq.s32.totalorder %s30, 0
      %p72 = por %p70, %p71
      %p73 = scmp.ne.s32.totalorder %s61, %s62
      %p74 = scmp.eq.s32.totalorder %s31, 1
      %p75 = por %p73, %p74
      %p77 = scmp.ne.s32.totalorder %s62, %s76
      %p78 = scmp.eq.s32.totalorder %s31, 0
      %p79 = por %p77, %p78
      %s81 = sadd.s32 %s80, 1
      %p84 = scmp.eq.s32.totalorder %s25, 1
      %p85 = scmp.ne.s32.totalorder %s80, %s82
      %p86 = scmp.eq.s32.totalorder %s25, 0
      %p87 = por %p85, %p86
      %p88 = scmp.ne.s32.totalorder %s80, %s82
      %p89 = scmp.eq.s32.totalorder %s30, 1
      %p90 = por %p88, %p89
      %p91 = scmp.ne.s32.totalorder %s82, %s83
      %p92 = scmp.eq.s32.totalorder %s30, 0
      %p93 = por %p91, %p92
      %p94 = scmp.ne.s32.totalorder %s82, %s83
      %p95 = scmp.eq.s32.totalorder %s31, 1
      %p96 = por %p94, %p95
      %p98 = scmp.ne.s32.totalorder %s83, %s97
      %p99 = scmp.eq.s32.totalorder %s31, 0
      %p100 = por %p98, %p99
      %s102 = sadd.s32 %s101, 1
      %p105 = scmp.eq.s32.totalorder %s25, 1
      %p106 = scmp.ne.s32.totalorder %s101, %s103
      %p107 = scmp.eq.s32.totalorder %s25, 0
      %p108 = por %p106, %p107
      %p109 = scmp.ne.s32.totalorder %s101, %s103
      %p110 = scmp.eq.s32.totalorder %s30, 1
      %p111 = por %p109, %p110
      %p112 = scmp.ne.s32.totalorder %s103, %s104
      %p113 = scmp.eq.s32.totalorder %s30, 0
      %p114 = por %p112, %p113
      %p115 = scmp.ne.s32.totalorder %s103, %s104
      %p116 = scmp.eq.s32.totalorder %s31, 1
      %p117 = por %p115, %p116
      %p119 = scmp.ne.s32.totalorder %s104, %s118
      %p120 = scmp.eq.s32.totalorder %s31, 0
      %p121 = por %p119, %p120
      %s123 = sadd.s32 %s122, 1
      %p126 = scmp.eq.s32.totalorder %s25, 1
      %p127 = scmp.ne.s32.totalorder %s122, %s124
      %p128 = scmp.eq.s32.totalorder %s25, 0
      %p129 = por %p127, %p128
      %p130 = scmp.ne.s32.totalorder %s122, %s124
      %p131 = scmp.eq.s32.totalorder %s30, 1
      %p132 = por %p130, %p131
      %p133 = scmp.ne.s32.totalorder %s124, %s125
      %p134 = scmp.eq.s32.totalorder %s30, 0
      %p135 = por %p133, %p134
      %p136 = scmp.ne.s32.totalorder %s124, %s125
      %p137 = scmp.eq.s32.totalorder %s31, 1
      %p138 = por %p136, %p137
      %p140 = scmp.ne.s32.totalorder %s125, %s139
      %p141 = scmp.eq.s32.totalorder %s31, 0
      %p142 = por %p140, %p141
      %s144 = sadd.s32 %s143, 1
      %p147 = scmp.eq.s32.totalorder %s25, 1
      %p148 = scmp.ne.s32.totalorder %s143, %s145
      %p149 = scmp.eq.s32.totalorder %s25, 0
      %p150 = por %p148, %p149
      %p151 = scmp.ne.s32.totalorder %s143, %s145
      %p152 = scmp.eq.s32.totalorder %s30, 1
      %p153 = por %p151, %p152
      %p154 = scmp.ne.s32.totalorder %s145, %s146
      %p155 = scmp.eq.s32.totalorder %s30, 0
      %p156 = por %p154, %p155
      %p157 = scmp.ne.s32.totalorder %s145, %s146
      %p158 = scmp.eq.s32.totalorder %s31, 1
      %p159 = por %p157, %p158
      %p161 = scmp.ne.s32.totalorder %s146, %s160
      %p162 = scmp.eq.s32.totalorder %s31, 0
      %p163 = por %p161, %p162
      %s165 = sadd.s32 %s164, 1
      %p168 = scmp.eq.s32.totalorder %s25, 1
      %p169 = scmp.ne.s32.totalorder %s164, %s166
      %p170 = scmp.eq.s32.totalorder %s25, 0
      %p171 = por %p169, %p170
      %p172 = scmp.ne.s32.totalorder %s164, %s166
      %p173 = scmp.eq.s32.totalorder %s30, 1
      %p174 = por %p172, %p173
      %p175 = scmp.ne.s32.totalorder %s166, %s167
      %p176 = scmp.eq.s32.totalorder %s30, 0
      %p177 = por %p175, %p176
      %p178 = scmp.ne.s32.totalorder %s166, %s167
      %p179 = scmp.eq.s32.totalorder %s31, 1
      %p180 = por %p178, %p179
      %p182 = scmp.ne.s32.totalorder %s167, %s181
      %p183 = scmp.eq.s32.totalorder %s31, 0
      %p184 = por %p182, %p183
      %s186 = sadd.s32 %s185, 1
      %p189 = scmp.eq.s32.totalorder %s25, 1
      %p190 = scmp.ne.s32.totalorder %s185, %s187
      %p191 = scmp.eq.s32.totalorder %s25, 0
      %p192 = por %p190, %p191
      %p193 = scmp.ne.s32.totalorder %s185, %s187
      %p194 = scmp.eq.s32.totalorder %s30, 1
      %p195 = por %p193, %p194
      %p196 = scmp.ne.s32.totalorder %s187, %s188
      %p197 = scmp.eq.s32.totalorder %s30, 0
      %p198 = por %p196, %p197
      %p199 = scmp.ne.s32.totalorder %s187, %s188
      %p200 = scmp.eq.s32.totalorder %s31, 1
      %p201 = por %p199, %p200
      %p203 = scmp.ne.s32.totalorder %s188, %s202
      %p204 = scmp.eq.s32.totalorder %s31, 0
      %p205 = por %p203, %p204
      %s207 = sadd.s32 %s206, 1
      %p210 = scmp.eq.s32.totalorder %s25, 1
      %p211 = scmp.ne.s32.totalorder %s206, %s208
      %p212 = scmp.eq.s32.totalorder %s25, 0
      %p213 = por %p211, %p212
      %p214 = scmp.ne.s32.totalorder %s206, %s208
      %p215 = scmp.eq.s32.totalorder %s30, 1
      %p216 = por %p214, %p215
      %p217 = scmp.ne.s32.totalorder %s208, %s209
      %p218 = scmp.eq.s32.totalorder %s30, 0
      %p219 = por %p217, %p218
      %p220 = scmp.ne.s32.totalorder %s208, %s209
      %p221 = scmp.eq.s32.totalorder %s31, 1
      %p222 = por %p220, %p221
      %p224 = scmp.ne.s32.totalorder %s209, %s223
      %p225 = scmp.eq.s32.totalorder %s31, 0
      %p226 = por %p224, %p225
      %s228 = sadd.s32 %s227, 1
      %p231 = scmp.eq.s32.totalorder %s25, 1
      %p232 = scmp.ne.s32.totalorder %s227, %s229
      %p233 = scmp.eq.s32.totalorder %s25, 0
      %p234 = por %p232, %p233
      %p235 = scmp.ne.s32.totalorder %s227, %s229
      %p236 = scmp.eq.s32.totalorder %s30, 1
      %p237 = por %p235, %p236
      %p238 = scmp.ne.s32.totalorder %s229, %s230
      %p239 = scmp.eq.s32.totalorder %s30, 0
      %p240 = por %p238, %p239
      %p241 = scmp.ne.s32.totalorder %s229, %s230
      %p242 = scmp.eq.s32.totalorder %s31, 1
      %p243 = por %p241, %p242
      %p245 = scmp.ne.s32.totalorder %s230, %s244
      %p246 = scmp.eq.s32.totalorder %s31, 0
      %p247 = por %p245, %p246
      %s248 = ssub.s32 %s25, %s32
      %p249 = scmp.eq.s32.totalorder %s248, 0
      %s251 = sadd.s32 %s250, 1
      %s252 = scalar_select %p249, %s250, %s251
      %p255 = pneg %p249
      %p256 = scmp.eq.s32.totalorder %s25, 1
      %p257 = por %p255, %p256
      %p258 = scmp.ne.s32.totalorder %s250, %s253
      %p259 = scmp.eq.s32.totalorder %s25, 0
      %p260 = por %p258, %p259
      %p261 = scmp.ne.s32.totalorder %s250, %s253
      %p262 = scmp.eq.s32.totalorder %s30, 1
      %p263 = por %p261, %p262
      %p264 = scmp.ne.s32.totalorder %s253, %s254
      %p265 = scmp.eq.s32.totalorder %s30, 0
      %p266 = por %p264, %p265
      %p267 = scmp.ne.s32.totalorder %s253, %s254
      %p268 = scmp.eq.s32.totalorder %s31, 1
      %p269 = por %p267, %p268
      %p271 = scmp.ne.s32.totalorder %s254, %s270
      %p272 = scmp.eq.s32.totalorder %s31, 0
      %p273 = por %p271, %p272
      %p274 = scmp.le.s32.totalorder 1, %s25
      %p275 = scmp.lt.s32.totalorder %s25, 3
      %p276 = pnand %p274, %p275
      %p277 = pneg %p276
      // Predicated region
      $region9: #{transformer_forward.1} parent=5 // pred_check
        _
      $region10: #{transformer_forward.1} parent=5 // pred_check_branch
        %279 = sbr.rel (%p276) target = $region12
      $region11: #{transformer_forward.1} parent=5 // pred_region
        %s280 = ssub.s32 %s25, 1
        // Predicated region
        $region13: #{transformer_forward.1} parent=11 // pred_check
          %p281 = pneg %p72
        $region14: #{transformer_forward.1} parent=11 // pred_check_branch
          %283 = sbr.rel (%p281) target = $region16
        $region15: #{transformer_forward.1} parent=11 // pred_region
          _
        $region16: #{transformer_forward.1} parent=11 // pred_fallthru
          _
        // Predicated region
        $region17: #{transformer_forward.1} parent=11 // pred_check
          %p284 = pneg %p93
        $region18: #{transformer_forward.1} parent=11 // pred_check_branch
          %286 = sbr.rel (%p284) target = $region20
        $region19: #{transformer_forward.1} parent=11 // pred_region
          _
        $region20: #{transformer_forward.1} parent=11 // pred_fallthru
          _
        // Predicated region
        $region21: #{transformer_forward.1} parent=11 // pred_check
          %p287 = pneg %p114
        $region22: #{transformer_forward.1} parent=11 // pred_check_branch
          %289 = sbr.rel (%p287) target = $region24
        $region23: #{transformer_forward.1} parent=11 // pred_region
          %291 = vsyncadd [#allocation6], 0
          %s293 = sshll.u32 %s3, 4
          %s294 = int_to_ptr.hbm [resolvable:$true] %s293
          %s295 = sshll.u32 [#allocation5], 4
          %s296 = int_to_ptr.vmem [resolvable:$true] %s295
          %298 = dma.hbm_to_vmem [thread:$0]  %s294, 32, %s296, [#allocation6]
        $region24: #{transformer_forward.1} parent=11 // pred_fallthru
          _
        // Predicated region
        $region25: #{transformer_forward.1} parent=11 // pred_check
          %p299 = pneg %p135
        $region26: #{transformer_forward.1} parent=11 // pred_check_branch
          %301 = sbr.rel (%p299) target = $region28
        $region27: #{transformer_forward.1} parent=11 // pred_region
          _
        $region28: #{transformer_forward.1} parent=11 // pred_fallthru
          _
        // Predicated region
        $region29: #{transformer_forward.1} parent=11 // pred_check
          %p302 = pneg %p156
        $region30: #{transformer_forward.1} parent=11 // pred_check_branch
          %304 = sbr.rel (%p302) target = $region32
        $region31: #{transformer_forward.1} parent=11 // pred_region
          %306 = vsyncadd [#allocation6], 0
          %s308 = sshll.u32 %s5, 4
          %s309 = int_to_ptr.hbm [resolvable:$true] %s308
          %s310 = sshll.u32 [#allocation7], 4
          %s311 = int_to_ptr.vmem [resolvable:$true] %s310
          %313 = dma.hbm_to_vmem [thread:$0]  %s309, 16, %s311, [#allocation6]
        $region32: #{transformer_forward.1} parent=11 // pred_fallthru
          _
        // Predicated region
        $region33: #{transformer_forward.1} parent=11 // pred_check
          %p314 = pneg %p177
        $region34: #{transformer_forward.1} parent=11 // pred_check_branch
          %316 = sbr.rel (%p314) target = $region36
        $region35: #{transformer_forward.1} parent=11 // pred_region
          %318 = vsyncadd [#allocation9], 0
          %s319 = sshll.u32 %s6, 4
          %s320 = int_to_ptr.hbm [resolvable:$true] %s319
          %s321 = sshll.u32 [#allocation8], 4
          %s322 = int_to_ptr.vmem [resolvable:$true] %s321
          %327 = dma.hbm_to_vmem [thread:$0]  %s320, 512, %s322, [#allocation9], 64, 64, 4
        $region36: #{transformer_forward.1} parent=11 // pred_fallthru
          _
        // Predicated region
        $region37: #{transformer_forward.1} parent=11 // pred_check
          %p328 = pneg %p198
        $region38: #{transformer_forward.1} parent=11 // pred_check_branch
          %330 = sbr.rel (%p328) target = $region40
        $region39: #{transformer_forward.1} parent=11 // pred_region
          %332 = vsyncadd [#allocation9], 0
          %s334 = sshll.u32 %s7, 4
          %s335 = int_to_ptr.hbm [resolvable:$true] %s334
          %s336 = sshll.u32 [#allocation10], 4
          %s337 = int_to_ptr.vmem [resolvable:$true] %s336
          %339 = dma.hbm_to_vmem [thread:$0]  %s335, 16, %s337, [#allocation9]
        $region40: #{transformer_forward.1} parent=11 // pred_fallthru
          _
        // Predicated region
        $region41: #{transformer_forward.1} parent=11 // pred_check
          %p340 = pneg %p219
        $region42: #{transformer_forward.1} parent=11 // pred_check_branch
          %342 = sbr.rel (%p340) target = $region44
        $region43: #{transformer_forward.1} parent=11 // pred_region
          _
        $region44: #{transformer_forward.1} parent=11 // pred_fallthru
          _
        // Predicated region
        $region45: #{transformer_forward.1} parent=11 // pred_check
          %p343 = pneg %p240
        $region46: #{transformer_forward.1} parent=11 // pred_check_branch
          %345 = sbr.rel (%p343) target = $region48
        $region47: #{transformer_forward.1} parent=11 // pred_region
          %347 = vsyncadd [#allocation12], 0
          %s349 = sshll.u32 %s9, 4
          %s350 = int_to_ptr.hbm [resolvable:$true] %s349
          %s351 = sshll.u32 [#allocation11], 4
          %s352 = int_to_ptr.vmem [resolvable:$true] %s351
          %354 = dma.hbm_to_vmem [thread:$0]  %s350, 16, %s352, [#allocation12]
        $region48: #{transformer_forward.1} parent=11 // pred_fallthru
          _
      $region12: #{transformer_forward.1} parent=5 // pred_fallthru
        _
      %p355 = scmp.lt.s32.totalorder %s25, 2
      // Predicated region
      $region49: #{transformer_forward.1} parent=5 // pred_check
        %p356 = pneg %p355
      $region50: #{transformer_forward.1} parent=5 // pred_check_branch
        %358 = sbr.rel (%p356) target = $region52
      $region51: #{transformer_forward.1} parent=5 // pred_region
        // Predicated region
        $region53: #{transformer_forward.1} parent=51 // pred_check
          %p359 = pneg %p45
        $region54: #{transformer_forward.1} parent=51 // pred_check_branch
          %361 = sbr.rel (%p359) target = $region56
        $region55: #{transformer_forward.1} parent=51 // pred_region
          %s362 = sand.u32 %s35, 1
          %s363 = scalar_lea.sflag [#allocation3], %s362
          %s364 = sand.u32 %s35, 1
          %s365 = smul.addr %s364, 8
          %s366 = scalar_lea.vmem [#allocation2], %s365
          %368 = vsyncadd %s363, 0
          %s369 = smul.addr %s25, 8
          %s370 = scalar_lea.hbm %s0, %s369
          %s372 = sshll.u32 %s370, 4
          %s373 = int_to_ptr.hbm [resolvable:$true] %s372
          %s374 = sshll.u32 %s366, 4
          %s375 = int_to_ptr.vmem [resolvable:$true] %s374
          %377 = dma.hbm_to_vmem [thread:$0]  %s373, 128, %s375, %s363
        $region56: #{transformer_forward.1} parent=51 // pred_fallthru
          _
      $region52: #{transformer_forward.1} parent=5 // pred_fallthru
        _
      %p378 = scmp.le.s32.totalorder 1, %s25
      %p379 = scmp.lt.s32.totalorder %s25, 3
      %p380 = pnand %p378, %p379
      %p381 = pneg %p380
      // Predicated region
      $region57: #{transformer_forward.1} parent=5 // pred_check
        _
      $region58: #{transformer_forward.1} parent=5 // pred_check_branch
        %383 = sbr.rel (%p380) target = $region60
      $region59: #{transformer_forward.1} parent=5 // pred_region
        %s384 = ssub.s32 %s25, 1
        %s385 = sand.u32 %s38, 1
        %s386 = scalar_lea.sflag [#allocation3], %s385
        %s387 = sand.u32 %s38, 1
        %s388 = smul.addr %s387, 8
        %s389 = scalar_lea.vmem [#allocation2], %s388
        // Predicated region
        $region61: #{transformer_forward.1} parent=59 // pred_check
          %p390 = pneg %p51
        $region62: #{transformer_forward.1} parent=59 // pred_check_branch
          %392 = sbr.rel (%p390) target = $region64
        $region63: #{transformer_forward.1} parent=59 // pred_region
          %394 = dma.done %s386, 128
        $region64: #{transformer_forward.1} parent=59 // pred_fallthru
          _
        // Predicated region
        $region65: #{transformer_forward.1} parent=59 // pred_check
          %p395 = pneg %p114
        $region66: #{transformer_forward.1} parent=59 // pred_check_branch
          %397 = sbr.rel (%p395) target = $region68
        $region67: #{transformer_forward.1} parent=59 // pred_region
          %399 = dma.done [#allocation6], 32
        $region68: #{transformer_forward.1} parent=59 // pred_fallthru
          _
        // Predicated region
        $region69: #{transformer_forward.1} parent=59 // pred_check
          %p400 = pneg %p156
        $region70: #{transformer_forward.1} parent=59 // pred_check_branch
          %402 = sbr.rel (%p400) target = $region72
        $region71: #{transformer_forward.1} parent=59 // pred_region
          %404 = dma.done [#allocation6], 16
        $region72: #{transformer_forward.1} parent=59 // pred_fallthru
          _
        // Predicated region
        $region73: #{transformer_forward.1} parent=59 // pred_check
          %p405 = pneg %p177
        $region74: #{transformer_forward.1} parent=59 // pred_check_branch
          %407 = sbr.rel (%p405) target = $region76
        $region75: #{transformer_forward.1} parent=59 // pred_region
          %409 = dma.done [#allocation9], 512
        $region76: #{transformer_forward.1} parent=59 // pred_fallthru
          _
        // Predicated region
        $region77: #{transformer_forward.1} parent=59 // pred_check
          %p410 = pneg %p198
        $region78: #{transformer_forward.1} parent=59 // pred_check_branch
          %412 = sbr.rel (%p410) target = $region80
        $region79: #{transformer_forward.1} parent=59 // pred_region
          %414 = dma.done [#allocation9], 16
        $region80: #{transformer_forward.1} parent=59 // pred_fallthru
          _
        // Predicated region
        $region81: #{transformer_forward.1} parent=59 // pred_check
          %p415 = pneg %p240
        $region82: #{transformer_forward.1} parent=59 // pred_check_branch
          %417 = sbr.rel (%p415) target = $region84
        $region83: #{transformer_forward.1} parent=59 // pred_region
          %419 = dma.done [#allocation12], 16
        $region84: #{transformer_forward.1} parent=59 // pred_fallthru
          _
        %s420 = sand.u32 %s38, 1
        %s421 = scalar_lea.sflag [#allocation3], %s420
        %s422 = sand.u32 %s38, 1
        %s423 = smul.addr %s422, 8
        %s424 = scalar_lea.vmem [#allocation2], %s423
        %p425 = pneg %p51
        %p426 = pneg %p48
        %p427 = pneg %p72
        %p428 = pneg %p69
        %p429 = pneg %p93
        %p430 = pneg %p90
        %p431 = pneg %p114
        %p432 = pneg %p111
        %p433 = pneg %p135
        %p434 = pneg %p132
        %p435 = pneg %p156
        %p436 = pneg %p153
        %p437 = pneg %p177
        %p438 = pneg %p174
        %p439 = pneg %p198
        %p440 = pneg %p195
        %p441 = pneg %p219
        %p442 = pneg %p216
        %p443 = pneg %p240
        %p444 = pneg %p237
        %p445 = pneg %p266
        %p446 = pneg %p263
        %s447 = sand.u32 %s253, 1
        %s448 = scalar_lea.sflag [#allocation4], %s447
        %s449 = sand.u32 %s253, 1
        %s450 = smul.addr %s449, 8
        %s451 = scalar_lea.vmem [#allocation13], %s450
        %v453 = vld [vmem:[%s389] sm:$0xff]
        %v454 = vld [vmem:[%s1] sm:$0xff]
        %v455 = vadd.f32 %v453, %v454
        %v456 = vpack.c.bf16 %v455, %v455
        %v457 = vld [vmem:[%s2] sm:$0xff]
        %v458 = vld [vmem:[%s2 + $0x8] sm:$0xff]
        %v459 = vld [vmem:[%s2 + $0x10] sm:$0xff]
        %v460 = vld [vmem:[%s2 + $0x18] sm:$0xff]
        %v461 = vld [vmem:[%s2 + $0x20] sm:$0xff]
        %v462 = vld [vmem:[%s2 + $0x28] sm:$0xff]
        %v463 = vld [vmem:[%s2 + $0x30] sm:$0xff]
        %v464 = vld [vmem:[%s2 + $0x38] sm:$0xff]
        %v465 = vld [vmem:[#allocation5] sm:$0x3]
        %v467 = vperm.slane %v465, 0
        %v468 = vperm.slane %v465, 1
        %v479 = vunpack.c.l.b16 %v457
        %v480 = vunpack.c.h.b16 %v457
        %v481 = vunpack.c.l.b16 %v458
        %v482 = vunpack.c.h.b16 %v458
        %v483 = vunpack.c.l.b16 %v459
        %v484 = vunpack.c.h.b16 %v459
        %v485 = vunpack.c.l.b16 %v460
        %v486 = vunpack.c.h.b16 %v460
        %v487 = vunpack.c.l.b16 %v461
        %v488 = vunpack.c.h.b16 %v461
        %v489 = vunpack.c.l.b16 %v462
        %v490 = vunpack.c.h.b16 %v462
        %v491 = vunpack.c.l.b16 %v463
        %v492 = vunpack.c.h.b16 %v463
        %v493 = vunpack.c.l.b16 %v464
        %v494 = vunpack.c.h.b16 %v464
        %v495 = vpack.c.b16 %v481, %v479
        %v496 = vpack.c.b16 %v482, %v480
        %v497 = vpack.c.b16 %v485, %v483
        %v498 = vpack.c.b16 %v486, %v484
        %v499 = vpack.c.b16 %v489, %v487
        %v500 = vpack.c.b16 %v490, %v488
        %v501 = vpack.c.b16 %v493, %v491
        %v502 = vpack.c.b16 %v494, %v492
        %vm511 = vcmask 523264
        %v513 = vsel %vm511, %v456, 0
        %515 = vmatpush.bf16.msra.mxu0 0
        %516 = vmatpush.bf16.msra.mxu0 0
        %517 = vmatpush.bf16.msra.mxu0 0
        %518 = vmatpush.bf16.msra.mxu0 0
        %519 = vmatpush.bf16.msra.mxu0 %v501
        %520 = vmatpush.bf16.msra.mxu0 %v499
        %521 = vmatpush.bf16.msra.mxu0 %v497
        %522 = vmatpush.bf16.msra.mxu0 %v495
        %523 = vmatmul.bf16.gmra.mxu0 %v513
        %v524 = vpop.f32.mrf.mxu0
        %v525 = vadd.f32 %v467, %v524
        %v526 = vpop.f32.mrf.mxu0
        %527 = vdwg.mxu0
        %528 = vmatpush.bf16.msra.mxu0 0
        %529 = vmatpush.bf16.msra.mxu0 0
        %530 = vmatpush.bf16.msra.mxu0 0
        %531 = vmatpush.bf16.msra.mxu0 0
        %532 = vmatpush.bf16.msra.mxu0 %v502
        %533 = vmatpush.bf16.msra.mxu0 %v500
        %534 = vmatpush.bf16.msra.mxu0 %v498
        %535 = vmatpush.bf16.msra.mxu0 %v496
        %536 = vmatmul.bf16.gmra.mxu0 %v513
        %v537 = vpop.f32.mrf.mxu0
        %v538 = vadd.f32 %v468, %v537
        %v539 = vpop.f32.mrf.mxu0
        %540 = vdwg.mxu0
        %v542 = vrot.slane %v525, 4
        %543 = vrot.lane.b32.xlu0 %v542, 96
        %v544 = vpop.permute.xlu0 %543
        %vm546 = vcmask 1043456
        %v547 = vsel %vm546, %v525, %v544
        %v548 = vmul.f32 %v547, 0.125
        %v549 = vpack.c.bf16 %v548, %v548
        %v550 = vpack.c.bf16 %v547, %v547
        %v552 = vrot.slane %v538, 4
        %553 = vrot.lane.b32.xlu0 %v552, 96
        %v554 = vpop.permute.xlu0 %553
        %v556 = vsel %vm546, %v538, %v554
        %v557 = vpack.c.bf16 %v556, %v556
        %559 = vrot.lane.b32.xlu0 %v550, 64
        %v560 = vpop.permute.xlu0 %559
        %vm561 = vcmask 261120
        %v563 = vsel %vm561, %v549, 0
        %v566 = vsel %vm561, %v560, 0
        %568 = vmatpush.bf16.xpose.msra.mxu0 0
        %569 = vmatpush.bf16.xpose.msra.mxu0 0
        %570 = vmatpush.bf16.xpose.msra.mxu0 0
        %571 = vmatpush.bf16.xpose.msra.mxu0 0
        %572 = vmatpush.bf16.xpose.msra.mxu0 0
        %573 = vmatpush.bf16.xpose.msra.mxu0 0
        %574 = vmatpush.bf16.xpose.msra.mxu0 0
        %575 = vmatpush.bf16.xpose.msra.mxu0 %v566
        %576 = vmatmul.bf16.gmra.mxu0 %v563
        %v577 = vpop.f32.mrf.mxu0
        %v578 = vadd.f32 0.0, %v577
        %v579 = vpop.f32.mrf.mxu0
        %580 = vdwg.mxu0
        %v581 = vpack.c.bf16 %v578, %v578
        %vm582 = vcmask 64512
        %v584 = vsel %vm582, %v581, 0
        %v587 = vsel %vm546, %v557, 0
        %589 = vmatpush.bf16.msra.mxu0 0
        %590 = vmatpush.bf16.msra.mxu0 0
        %591 = vmatpush.bf16.msra.mxu0 0
        %592 = vmatpush.bf16.msra.mxu0 0
        %593 = vmatpush.bf16.msra.mxu0 0
        %594 = vmatpush.bf16.msra.mxu0 0
        %595 = vmatpush.bf16.msra.mxu0 0
        %596 = vmatpush.bf16.msra.mxu0 %v587
        %597 = vmatmul.bf16.gmra.mxu0 %v584
        %v598 = vpop.f32.mrf.mxu0
        %v599 = vadd.f32 0.0, %v598
        %v600 = vpop.f32.mrf.mxu0
        %601 = vdwg.mxu0
        %v603 = vrot.slane %v599, 4
        %604 = vrot.lane.b32.xlu0 %v603, 32
        %v605 = vpop.permute.xlu0 %604
        %v607 = vsel %vm561, %v599, %v605
        %609 = vrot.lane.b32.xlu0 %v525, 96
        %v610 = vpop.permute.xlu0 %609
        %v612 = vsel %vm546, %v542, %v610
        %v613 = vmul.f32 %v612, 0.125
        %v614 = vpack.c.bf16 %v613, %v613
        %v615 = vpack.c.bf16 %v612, %v612
        %617 = vrot.lane.b32.xlu0 %v538, 96
        %v618 = vpop.permute.xlu0 %617
        %v620 = vsel %vm546, %v552, %v618
        %v621 = vpack.c.bf16 %v620, %v620
        %623 = vrot.lane.b32.xlu0 %v615, 64
        %v624 = vpop.permute.xlu0 %623
        %v626 = vsel %vm561, %v614, 0
        %v629 = vsel %vm561, %v624, 0
        %631 = vmatpush.bf16.xpose.msra.mxu0 0
        %632 = vmatpush.bf16.xpose.msra.mxu0 0
        %633 = vmatpush.bf16.xpose.msra.mxu0 0
        %634 = vmatpush.bf16.xpose.msra.mxu0 0
        %635 = vmatpush.bf16.xpose.msra.mxu0 0
        %636 = vmatpush.bf16.xpose.msra.mxu0 0
        %637 = vmatpush.bf16.xpose.msra.mxu0 0
        %638 = vmatpush.bf16.xpose.msra.mxu0 %v629
        %639 = vmatmul.bf16.gmra.mxu0 %v626
        %v640 = vpop.f32.mrf.mxu0
        %v641 = vadd.f32 0.0, %v640
        %v642 = vpop.f32.mrf.mxu0
        %643 = vdwg.mxu0
        %v644 = vpack.c.bf16 %v641, %v641
        %v646 = vsel %vm582, %v644, 0
        %v649 = vsel %vm546, %v621, 0
        %651 = vmatpush.bf16.msra.mxu0 0
        %652 = vmatpush.bf16.msra.mxu0 0
        %653 = vmatpush.bf16.msra.mxu0 0
        %654 = vmatpush.bf16.msra.mxu0 0
        %655 = vmatpush.bf16.msra.mxu0 0
        %656 = vmatpush.bf16.msra.mxu0 0
        %657 = vmatpush.bf16.msra.mxu0 0
        %658 = vmatpush.bf16.msra.mxu0 %v649
        %659 = vmatmul.bf16.gmra.mxu0 %v646
        %v660 = vpop.f32.mrf.mxu0
        %v661 = vadd.f32 0.0, %v660
        %v662 = vpop.f32.mrf.mxu0
        %663 = vdwg.mxu0
        %v665 = vrot.slane %v661, 4
        %666 = vrot.lane.b32.xlu0 %v665, 32
        %v667 = vpop.permute.xlu0 %666
        %v669 = vsel %vm561, %v661, %v667
        %v671 = vrot.slane %v669, 4
        %v673 = vsel %vm546, %v607, %v671
        %v674 = vpack.c.bf16 %v673, %v673
        %v675 = vld [vmem:[%s4] sm:$0xf]
        %v676 = vld [vmem:[%s4 + $0x4] sm:$0xf]
        %v677 = vld [vmem:[%s4 + $0x8] sm:$0xf]
        %v678 = vld [vmem:[%s4 + $0xc] sm:$0xf]
        %v679 = vld [vmem:[%s4 + $0x10] sm:$0xf]
        %v680 = vld [vmem:[%s4 + $0x14] sm:$0xf]
        %v681 = vld [vmem:[%s4 + $0x18] sm:$0xf]
        %v682 = vld [vmem:[%s4 + $0x1c] sm:$0xf]
        %v683 = vld [vmem:[#allocation7] sm:$0x1]
        %v685 = vperm.slane %v683, 0
        %v695 = vunpack.c.l.b16 %v675
        %v696 = vunpack.c.l.b16 %v676
        %v697 = vunpack.c.l.b16 %v677
        %v698 = vunpack.c.l.b16 %v678
        %v699 = vunpack.c.l.b16 %v679
        %v700 = vunpack.c.l.b16 %v680
        %v701 = vunpack.c.l.b16 %v681
        %v702 = vunpack.c.l.b16 %v682
        %v703 = vpack.c.b16 %v696, %v695
        %v704 = vpack.c.b16 %v698, %v697
        %v705 = vpack.c.b16 %v700, %v699
        %v706 = vpack.c.b16 %v702, %v701
        %v712 = vsel %vm511, %v674, 0
        %714 = vmatpush.bf16.msra.mxu0 0
        %715 = vmatpush.bf16.msra.mxu0 0
        %716 = vmatpush.bf16.msra.mxu0 0
        %717 = vmatpush.bf16.msra.mxu0 0
        %718 = vmatpush.bf16.msra.mxu0 %v706
        %719 = vmatpush.bf16.msra.mxu0 %v705
        %720 = vmatpush.bf16.msra.mxu0 %v704
        %721 = vmatpush.bf16.msra.mxu0 %v703
        %722 = vmatmul.bf16.gmra.mxu0 %v712
        %v723 = vpop.f32.mrf.mxu0
        %v724 = vadd.f32 %v685, %v723
        %v725 = vpop.f32.mrf.mxu0
        %726 = vdwg.mxu0
        %v727 = vadd.f32 %v455, %v724
        %v728 = vsel %vm511, %v727, 0.0
        %729 = vadd.xlane.f32.xlu0 %v728
        %v730 = vpop.xlane.xlu0 %729
        %v731 = vrot.slane %v730, 4
        %v732 = vadd.f32 %v730, %v731
        %v733 = vrot.slane %v732, 2
        %v734 = vadd.f32 %v732, %v733
        %v735 = vrot.slane %v734, 1
        %v736 = vadd.f32 %v734, %v735
        %s737 = vtos %v736
        %v738 = vstv %s737
        %v739 = vmul.f32 %v738, 0.001953125
        %v740 = vsub.f32 %v727, %v739
        %v741 = vmul.f32 %v740, %v740
        %v742 = vsel %vm511, %v741, 0.0
        %743 = vadd.xlane.f32.xlu0 %v742
        %v744 = vpop.xlane.xlu0 %743
        %v745 = vrot.slane %v744, 4
        %v746 = vadd.f32 %v744, %v745
        %v747 = vrot.slane %v746, 2
        %v748 = vadd.f32 %v746, %v747
        %v749 = vrot.slane %v748, 1
        %v750 = vadd.f32 %v748, %v749
        %s751 = vtos %v750
        %v752 = vstv %s751
        %v753 = vmul.f32 %v752, 0.001953125
        %v754 = vadd.f32 %v753, 1e-05
        %v755 = vrsqrt.pop %v754
        %v756 = vmul.f32 %v755, %v754
        %v757 = vmul.f32 %v756, %v755
        %v758 = vmul.f32 0.5, %v757
        %v759 = vsub.f32 1.5, %v758
        %v760 = vmul.f32 %v755, %v759
        %vm761 = vweird.f32 %v754
        %vm762 = vweird.f32 %v755
        %vm763 = vmor %vm761, %vm762
        %v764 = vsel %vm763, %v755, %v760
        %v765 = vmul.f32 %v740, %v764
        %v766 = vpack.c.bf16 %v765, %v765
        %v767 = vld [vmem:[#allocation8] sm:$0xf]
        %v768 = vld [vmem:[#allocation8 + $0x4] sm:$0xf]
        %v769 = vld [vmem:[#allocation8 + $0x8] sm:$0xf]
        %v770 = vld [vmem:[#allocation8 + $0xc] sm:$0xf]
        %v771 = vld [vmem:[#allocation8 + $0x10] sm:$0xf]
        %v772 = vld [vmem:[#allocation8 + $0x14] sm:$0xf]
        %v773 = vld [vmem:[#allocation8 + $0x18] sm:$0xf]
        %v774 = vld [vmem:[#allocation8 + $0x1c] sm:$0xf]
        %v775 = vld [vmem:[#allocation10] sm:$0x1]
        %v777 = vperm.slane %v775, 0
        %v787 = vunpack.c.l.b16 %v767
        %v788 = vunpack.c.l.b16 %v768
        %v789 = vunpack.c.l.b16 %v769
        %v790 = vunpack.c.l.b16 %v770
        %v791 = vunpack.c.l.b16 %v771
        %v792 = vunpack.c.l.b16 %v772
        %v793 = vunpack.c.l.b16 %v773
        %v794 = vunpack.c.l.b16 %v774
        %v795 = vpack.c.b16 %v788, %v787
        %v796 = vpack.c.b16 %v790, %v789
        %v797 = vpack.c.b16 %v792, %v791
        %v798 = vpack.c.b16 %v794, %v793
        %v804 = vsel %vm511, %v766, 0
        %806 = vmatpush.bf16.msra.mxu0 0
        %807 = vmatpush.bf16.msra.mxu0 0
        %808 = vmatpush.bf16.msra.mxu0 0
        %809 = vmatpush.bf16.msra.mxu0 0
        %810 = vmatpush.bf16.msra.mxu0 %v798
        %811 = vmatpush.bf16.msra.mxu0 %v797
        %812 = vmatpush.bf16.msra.mxu0 %v796
        %813 = vmatpush.bf16.msra.mxu0 %v795
        %814 = vmatmul.bf16.gmra.mxu0 %v804
        %v815 = vpop.f32.mrf.mxu0
        %v816 = vadd.f32 %v777, %v815
        %v817 = vpop.f32.mrf.mxu0
        %818 = vdwg.mxu0
        %v819 = vmax.f32 %v816, 0.0
        %v820 = vpack.c.bf16 %v819, %v819
        %v821 = vld [vmem:[%s8] sm:$0xf]
        %v822 = vld [vmem:[%s8 + $0x4] sm:$0xf]
        %v823 = vld [vmem:[%s8 + $0x8] sm:$0xf]
        %v824 = vld [vmem:[%s8 + $0xc] sm:$0xf]
        %v825 = vld [vmem:[%s8 + $0x10] sm:$0xf]
        %v826 = vld [vmem:[%s8 + $0x14] sm:$0xf]
        %v827 = vld [vmem:[%s8 + $0x18] sm:$0xf]
        %v828 = vld [vmem:[%s8 + $0x1c] sm:$0xf]
        %v829 = vld [vmem:[%s8 + $0x20] sm:$0xf]
        %v830 = vld [vmem:[%s8 + $0x24] sm:$0xf]
        %v831 = vld [vmem:[%s8 + $0x28] sm:$0xf]
        %v832 = vld [vmem:[%s8 + $0x2c] sm:$0xf]
        %v833 = vld [vmem:[%s8 + $0x30] sm:$0xf]
        %v834 = vld [vmem:[%s8 + $0x34] sm:$0xf]
        %v835 = vld [vmem:[%s8 + $0x38] sm:$0xf]
        %v836 = vld [vmem:[%s8 + $0x3c] sm:$0xf]
        %v853 = vunpack.c.l.b16 %v821
        %v854 = vunpack.c.l.b16 %v822
        %v855 = vunpack.c.l.b16 %v823
        %v856 = vunpack.c.l.b16 %v824
        %v857 = vunpack.c.l.b16 %v825
        %v858 = vunpack.c.l.b16 %v826
        %v859 = vunpack.c.l.b16 %v827
        %v860 = vunpack.c.l.b16 %v828
        %v861 = vunpack.c.l.b16 %v829
        %v862 = vunpack.c.l.b16 %v830
        %v863 = vunpack.c.l.b16 %v831
        %v864 = vunpack.c.l.b16 %v832
        %v865 = vunpack.c.l.b16 %v833
        %v866 = vunpack.c.l.b16 %v834
        %v867 = vunpack.c.l.b16 %v835
        %v868 = vunpack.c.l.b16 %v836
        %v869 = vpack.c.b16 %v854, %v853
        %v870 = vpack.c.b16 %v856, %v855
        %v871 = vpack.c.b16 %v858, %v857
        %v872 = vpack.c.b16 %v860, %v859
        %v873 = vpack.c.b16 %v862, %v861
        %v874 = vpack.c.b16 %v864, %v863
        %v875 = vpack.c.b16 %v866, %v865
        %v876 = vpack.c.b16 %v868, %v867
        %885 = vmatpush.bf16.msra.mxu0 %v876
        %886 = vmatpush.bf16.msra.mxu0 %v875
        %887 = vmatpush.bf16.msra.mxu0 %v874
        %888 = vmatpush.bf16.msra.mxu0 %v873
        %889 = vmatpush.bf16.msra.mxu0 %v872
        %890 = vmatpush.bf16.msra.mxu0 %v871
        %891 = vmatpush.bf16.msra.mxu0 %v870
        %892 = vmatpush.bf16.msra.mxu0 %v869
        %893 = vmatmul.bf16.gmra.mxu0 %v820
        %v894 = vpop.f32.mrf.mxu0
        %v895 = vadd.f32 0.0, %v894
        %v896 = vpop.f32.mrf.mxu0
        %897 = vdwg.mxu0
        %v898 = vadd.f32 %v765, %v895
        %v899 = vld [vmem:[#allocation11] sm:$0x1]
        %v901 = vperm.slane %v899, 0
        %v903 = vadd.f32 %v898, %v901
        %v904 = vsel %vm511, %v903, 0.0
        %905 = vadd.xlane.f32.xlu0 %v904
        %v906 = vpop.xlane.xlu0 %905
        %v907 = vrot.slane %v906, 4
        %v908 = vadd.f32 %v906, %v907
        %v909 = vrot.slane %v908, 2
        %v910 = vadd.f32 %v908, %v909
        %v911 = vrot.slane %v910, 1
        %v912 = vadd.f32 %v910, %v911
        %s913 = vtos %v912
        %v914 = vstv %s913
        %v915 = vmul.f32 %v914, 0.001953125
        %v916 = vsub.f32 %v903, %v915
        %v917 = vmul.f32 %v916, %v916
        %v918 = vsel %vm511, %v917, 0.0
        %919 = vadd.xlane.f32.xlu0 %v918
        %v920 = vpop.xlane.xlu0 %919
        %v921 = vrot.slane %v920, 4
        %v922 = vadd.f32 %v920, %v921
        %v923 = vrot.slane %v922, 2
        %v924 = vadd.f32 %v922, %v923
        %v925 = vrot.slane %v924, 1
        %v926 = vadd.f32 %v924, %v925
        %s927 = vtos %v926
        %v928 = vstv %s927
        %v929 = vmul.f32 %v928, 0.001953125
        %v930 = vadd.f32 %v929, 1e-05
        %v931 = vrsqrt.pop %v930
        %v932 = vmul.f32 %v931, %v930
        %v933 = vmul.f32 %v932, %v931
        %v934 = vmul.f32 0.5, %v933
        %v935 = vsub.f32 1.5, %v934
        %v936 = vmul.f32 %v931, %v935
        %vm937 = vweird.f32 %v930
        %vm938 = vweird.f32 %v931
        %vm939 = vmor %vm937, %vm938
        %v940 = vsel %vm939, %v931, %v936
        %v941 = vmul.f32 %v916, %v940
        %942 = vst.msk [vmem:[%s451] sm:$0xff] %vm511, %v941
        %s943 = sand.u32 %s253, 1
        %s944 = scalar_lea.sflag [#allocation4], %s943
        %s945 = sand.u32 %s253, 1
        %s946 = smul.addr %s945, 8
        %s947 = scalar_lea.vmem [#allocation13], %s946
        // Predicated region
        $region85: #{transformer_forward.1} parent=59 // pred_check
          %p948 = pneg %p263
        $region86: #{transformer_forward.1} parent=59 // pred_check_branch
          %950 = sbr.rel (%p948) target = $region88
        $region87: #{transformer_forward.1} parent=59 // pred_region
          %952 = vsyncadd %s944, 0
          %s953 = smul.addr %s30, 8
          %s954 = scalar_lea.hbm %s10, %s953
          %s956 = sshll.u32 %s947, 4
          %s957 = int_to_ptr.vmem [resolvable:$true] %s956
          %s958 = sshll.u32 %s954, 4
          %s959 = int_to_ptr.hbm [resolvable:$true] %s958
          %961 = dma.vmem_to_hbm [thread:$0]  %s957, 128, %s959, %s944
        $region88: #{transformer_forward.1} parent=59 // pred_fallthru
          _
      $region60: #{transformer_forward.1} parent=5 // pred_fallthru
        _
      %p962 = scmp.le.s32.totalorder 2, %s25
      // Predicated region
      $region89: #{transformer_forward.1} parent=5 // pred_check
        %p963 = pneg %p962
      $region90: #{transformer_forward.1} parent=5 // pred_check_branch
        %965 = sbr.rel (%p963) target = $region92
      $region91: #{transformer_forward.1} parent=5 // pred_region
        %s966 = ssub.s32 %s25, 2
        // Predicated region
        $region93: #{transformer_forward.1} parent=91 // pred_check
          %p967 = pneg %p269
        $region94: #{transformer_forward.1} parent=91 // pred_check_branch
          %969 = sbr.rel (%p967) target = $region96
        $region95: #{transformer_forward.1} parent=91 // pred_region
          %s970 = sand.u32 %s254, 1
          %s971 = scalar_lea.sflag [#allocation4], %s970
          %s972 = sand.u32 %s254, 1
          %s973 = smul.addr %s972, 8
          %s974 = scalar_lea.vmem [#allocation13], %s973
          %976 = dma.done %s971, 128
        $region96: #{transformer_forward.1} parent=91 // pred_fallthru
          _
      $region92: #{transformer_forward.1} parent=5 // pred_fallthru
        _
    $region6: #{transformer_forward.1} parent=1 // loop_footer
      %s29 = sadd.s32 1, %s25
    $region7: #{transformer_forward.1} parent=1 // loop_footer_branch
      %24 = sbr.rel target = $region3
    $region8: #{transformer_forward.1} parent=1 // loop_exit
      _
    %977 = vsyncpa [#allocation3], 1
    %s978 = scalar_lea.sflag [#allocation3], 1
    %979 = vsyncpa %s978, 1
    %980 = vsyncpa [#allocation6], 1
    %981 = vsyncpa [#allocation9], 1
    %982 = vsyncpa [#allocation12], 1
    %983 = vsyncpa [#allocation4], 1
    %s984 = scalar_lea.sflag [#allocation4], 1
    %985 = vsyncpa %s984, 1

</llo_original>
